<compile_context>
chip_gen: v6e
topology: v6e:2x2x1
jax: 0.10.0
libtpu: 0.0.40
codegen_flags: <defaults>
</compile_context>

<pallas_src>
import jax
import jax.numpy as jnp
from jax.experimental import pallas as pl
from jax.experimental.pallas import tpu as pltpu

OUT_PAD = 8  # lane width of the packed output (QA -> col 0, QB -> col 1)


def _round_up(x, m):
    return ((x + m - 1) // m) * m


# --------------------------------------------------------------------------- #
# Kernels (one batch tile, everything resident in VMEM)
# --------------------------------------------------------------------------- #
def _critic_kernel_fused_l2(
    s_ref, a_ref,
    w1s_ref, w1a_ref, b1_ref,
    w2_ref, b2_ref,
    wo_ref, bo_ref,
    out_ref,
):
    """Twin heads fused on lanes; layer-2 is a (2H,2H) block-diagonal (H < 128).

    Shapes per tile:
      s_ref (bm,S) bf16, a_ref (bm,A) bf16
      w1s (S,2H) bf16, w1a (A,2H) bf16, b1 (1,2H) f32
      w2  (2H,2H) bf16 block-diag,      b2 (1,2H) f32
      wo  (2H,OUT_PAD) bf16,            bo (1,OUT_PAD) f32
      out (bm,OUT_PAD) f32  -- col 0 = QA, col 1 = QB
    """
    # Layer 1: split-K over [state | action], twin heads stacked on lanes.
    h = jnp.dot(s_ref[...], w1s_ref[...], preferred_element_type=jnp.float32)
    h = h + jnp.dot(a_ref[...], w1a_ref[...], preferred_element_type=jnp.float32)
    h = jnp.maximum(h + b1_ref[...], 0.0).astype(w2_ref.dtype)

    # Layer 2: block-diagonal keeps the two heads independent (one MXU pass at 2H=128).
    h = jnp.dot(h, w2_ref[...], preferred_element_type=jnp.float32) + b2_ref[...]
    h = jnp.maximum(h, 0.0).astype(wo_ref.dtype)

    # Output layer: packed (2H, OUT_PAD) weight, masked narrow store.
    q = jnp.dot(h, wo_ref[...], preferred_element_type=jnp.float32) + bo_ref[...]
    out_ref[...] = q.astype(out_ref.dtype)


def _critic_kernel_split_l2(
    s_ref, a_ref,
    w1s_ref, w1a_ref, b1_ref,
    wA2_ref, wB2_ref, b2_ref,
    wo_ref, bo_ref,
    out_ref,
):
    """Same network but layer-2 as two (H,H) matmuls (used when H is a multiple
    of 128): halves layer-2 FLOPs/DMA/VMEM vs. the block-diagonal form, and the
    lane slices of `h` are 128-aligned so they are free."""
    H = wA2_ref.shape[0]

    h = jnp.dot(s_ref[...], w1s_ref[...], preferred_element_type=jnp.float32)
    h = h + jnp.dot(a_ref[...], w1a_ref[...], preferred_element_type=jnp.float32)
    h = jnp.maximum(h + b1_ref[...], 0.0).astype(wA2_ref.dtype)

    hA = jnp.dot(h[:, :H], wA2_ref[...], preferred_element_type=jnp.float32)
    hB = jnp.dot(h[:, H:], wB2_ref[...], preferred_element_type=jnp.float32)
    h2 = jnp.concatenate([hA, hB], axis=1) + b2_ref[...]
    h2 = jnp.maximum(h2, 0.0).astype(wo_ref.dtype)

    q = jnp.dot(h2, wo_ref[...], preferred_element_type=jnp.float32) + bo_ref[...]
    out_ref[...] = q.astype(out_ref.dtype)


# --------------------------------------------------------------------------- #
# One-time parameter packing (call ONCE, outside the hot path)
# --------------------------------------------------------------------------- #
def pack_critic_params(params, state_dim):
    """Pack twin-head weights into fused kernel operands.

    Matmul weights -> bf16 (MXU-native, halves weight DMA/VMEM); biases stay f32.
    """
    S = state_dim
    H = params["wA1"].shape[1]
    wdt = jnp.bfloat16

    # Layer 1: split rows into state/action parts, stack head A | head B on lanes.
    w1s = jnp.concatenate([params["wA1"][:S], params["wB1"][:S]], axis=1).astype(wdt)  # (S, 2H)
    w1a = jnp.concatenate([params["wA1"][S:], params["wB1"][S:]], axis=1).astype(wdt)  # (A, 2H)
    b1 = jnp.concatenate([params["bA1"], params["bB1"]], axis=1).astype(jnp.float32)   # (1, 2H)
    b2 = jnp.concatenate([params["bA2"], params["bB2"]], axis=1).astype(jnp.float32)   # (1, 2H)

    # Output layer: zero-padded to OUT_PAD lanes (col 0 = QA, col 1 = QB).
    wo = jnp.zeros((2 * H, OUT_PAD), jnp.float32)
    wo = wo.at[:H, 0].set(params["wAout"][:, 0]).at[H:, 1].set(params["wBout"][:, 0])
    bo = jnp.zeros((1, OUT_PAD), jnp.float32)
    bo = bo.at[0, 0].set(params["bAout"][0, 0]).at[0, 1].set(params["bBout"][0, 0])

    packed = dict(w1s=w1s, w1a=w1a, b1=b1, b2=b2, wo=wo.astype(wdt), bo=bo)

    # Layer 2 representation: block-diag fusion is free at 2H <= 128; for larger
    # (128-aligned) H, keep the two (H,H) blocks separate (half the FLOPs/bytes).
    if H < 128 or (H % 128) != 0:
        w2 = jnp.zeros((2 * H, 2 * H), jnp.float32)
        w2 = w2.at[:H, :H].set(params["wA2"]).at[H:, H:].set(params["wB2"])
        packed["w2"] = w2.astype(wdt)
    else:
        packed["wA2"] = params["wA2"].astype(wdt)
        packed["wB2"] = params["wB2"].astype(wdt)
    return packed


def _weight_spec(shape):
    """Whole-array resident weight, constant across the batch grid axis.

    Buffered(1): constant-index weights are never re-fetched, so single
    buffering halves their VMEM footprint with zero extra DMA.
    """
    idx = lambda i: (0, 0)
    try:
        return pl.BlockSpec(shape, idx, pipeline_mode=pl.Buffered(1))
    except (AttributeError, TypeError, ValueError):
        # TODO(synk): fallback keeps default double-buffering if Buffered(1) is
        # unavailable in this JAX version.
        return pl.BlockSpec(shape, idx)


# --------------------------------------------------------------------------- #
# Forward wrapper
# --------------------------------------------------------------------------- #
def critic_forward(state, action, packed, *, block_batch=512):
    """Twin-Q forward. `packed` comes from pack_critic_params (call it once)."""
    state = state.astype(jnp.bfloat16)
    action = action.astype(jnp.bfloat16)
    B, S = state.shape
    _, A = action.shape

    # ---- balanced batch tiling ----------------------------------------- #
    num_tiles = max(1, -(-B // block_batch))
    if B >= 128 and num_tiles < 2:
        num_tiles = 2  # v7x: >= 2 parallel tiles keeps both TensorCores busy
    bm = _round_up(-(-B // num_tiles), 8)
    B_pad = num_tiles * bm
    if B_pad != B:
        state = jnp.pad(state, ((0, B_pad - B), (0, 0)))
        action = jnp.pad(action, ((0, B_pad - B), (0, 0)))

    # ---- kernel / operand selection ------------------------------------ #
    if "w2" in packed:
        kernel = _critic_kernel_fused_l2
        weights = (packed["w1s"], packed["w1a"], packed["b1"],
                   packed["w2"], packed["b2"], packed["wo"], packed["bo"])
    else:
        kernel = _critic_kernel_split_l2
        weights = (packed["w1s"], packed["w1a"], packed["b1"],
                   packed["wA2"], packed["wB2"], packed["b2"],
                   packed["wo"], packed["bo"])

    in_specs = [
        pl.BlockSpec((bm, S), lambda i: (i, 0)),   # state tile
        pl.BlockSpec((bm, A), lambda i: (i, 0)),   # action tile
    ] + [_weight_spec(w.shape) for w in weights]
    out_specs = pl.BlockSpec((bm, OUT_PAD), lambda i: (i, 0))

    # ---- VMEM budget (raise scoped default only when actually needed) --- #
    weight_bytes = sum(int(w.size) * w.dtype.itemsize for w in weights)
    io_bytes = 2 * (bm * (S + A) * 2) + 2 * (bm * OUT_PAD * 4)  # double-buffered tiles
    est_vmem = 2 * weight_bytes + io_bytes                      # worst case (no Buffered(1))
    vmem_limit = None
    if est_vmem > 10 * (1 << 20):
        vmem_limit = min(est_vmem + (8 << 20), 96 << 20)

    out = pl.pallas_call(
        kernel,
        out_shape=jax.ShapeDtypeStruct((B_pad, OUT_PAD), jnp.float32),
        grid_spec=pltpu.PrefetchScalarGridSpec(
            num_scalar_prefetch=0,
            grid=(B_pad // bm,),
            in_specs=in_specs,
            out_specs=out_specs,
        ),
        compiler_params=pltpu.CompilerParams(
            dimension_semantics=("parallel",),
            vmem_limit_bytes=vmem_limit,
        ),
    )(state, action, *weights)

    qa = out[:B, 0:1]
    qb = out[:B, 1:2]
    return qa, qb


# --------------------------------------------------------------------------- #
# Init + pure-JAX reference (matches the PyTorch forward)
# --------------------------------------------------------------------------- #
def init_critic_params(key, state_dim, action_dim, hidden_dim):
    """torch.nn.Linear-style init: U(-1/sqrt(fan_in), 1/sqrt(fan_in)); stored (in, out)."""
    D = state_dim + action_dim
    H = hidden_dim

    def linear(key, fan_in, fan_out):
        kw, kb = jax.random.split(key)
        bound = 1.0 / jnp.sqrt(fan_in)
        w = jax.random.uniform(kw, (fan_in, fan_out), jnp.float32, -bound, bound)
        b = jax.random.uniform(kb, (1, fan_out), jnp.float32, -bound, bound)
        return w, b

    keys = jax.random.split(key, 6)
    wA1, bA1 = linear(keys[0], D, H)
    wA2, bA2 = linear(keys[1], H, H)
    wAo, bAo = linear(keys[2], H, 1)
    wB1, bB1 = linear(keys[3], D, H)
    wB2, bB2 = linear(keys[4], H, H)
    wBo, bBo = linear(keys[5], H, 1)
    return dict(
        wA1=wA1, bA1=bA1, wA2=wA2, bA2=bA2, wAout=wAo, bAout=bAo,
        wB1=wB1, bB1=bB1, wB2=wB2, bB2=bB2, wBout=wBo, bBout=bBo,
    )


def critic_forward_ref(state, action, params):
    x = jnp.concatenate([state, action], axis=1)
    a = jax.nn.relu(x @ params["wA1"] + params["bA1"])
    a = jax.nn.relu(a @ params["wA2"] + params["bA2"])
    qa = a @ params["wAout"] + params["bAout"]
    b = jax.nn.relu(x @ params["wB1"] + params["bB1"])
    b = jax.nn.relu(b @ params["wB2"] + params["bB2"])
    qb = b @ params["wBout"] + params["bBout"]
    return qa, qb


if __name__ == "__main__":
    # bf16 operands with f32 accumulation -> compare against the f32 reference
    # with a loosened tolerance.
    TOL = dict(atol=1e-1, rtol=1e-1)

    key = jax.random.PRNGKey(0)
    k_state, k_action, k_params, k_params2 = jax.random.split(key, 4)

    state_dim, action_dim = 24, 8
    forward = jax.jit(critic_forward)

    # --- case 1: small batch, H=64 (fused block-diag layer-2, 2H = 128) ----- #
    batch = 8
    hidden_dim = 64
    state = jax.random.normal(k_state, (batch, state_dim), jnp.float32)
    action = jax.random.normal(k_action, (batch, action_dim), jnp.float32)
    params = init_critic_params(k_params, state_dim, action_dim, hidden_dim)
    packed = pack_critic_params(params, state_dim)          # packed ONCE, reused below

    qa, qb = jax.block_until_ready(forward(state, action, packed))
    qa_ref, qb_ref = critic_forward_ref(state, action, params)
    assert qa.shape == (batch, 1) and qb.shape == (batch, 1)
    assert jnp.allclose(qa, qa_ref, **TOL)
    assert jnp.allclose(qb, qb_ref, **TOL)

    # --- case 2: ragged/larger batch (balanced 2-tile grid, padding path) --- #
    batch2 = 300
    state2 = jax.random.normal(k_state, (batch2, state_dim), jnp.float32)
    action2 = jax.random.normal(k_action, (batch2, action_dim), jnp.float32)
    qa2, qb2 = jax.block_until_ready(forward(state2, action2, packed))
    qa2_ref, qb2_ref = critic_forward_ref(state2, action2, params)
    assert qa2.shape == (batch2, 1) and qb2.shape == (batch2, 1)
    assert jnp.allclose(qa2, qa2_ref, **TOL)
    assert jnp.allclose(qb2, qb2_ref, **TOL)

    # --- case 3: H=128 exercises the split layer-2 kernel path -------------- #
    batch3, hidden3 = 32, 128
    params3 = init_critic_params(k_params2, state_dim, action_dim, hidden3)
    packed3 = pack_critic_params(params3, state_dim)
    state3 = jax.random.normal(k_state, (batch3, state_dim), jnp.float32)
    action3 = jax.random.normal(k_action, (batch3, action_dim), jnp.float32)
    qa3, qb3 = jax.block_until_ready(forward(state3, action3, packed3))
    qa3_ref, qb3_ref = critic_forward_ref(state3, action3, params3)
    assert jnp.allclose(qa3, qa3_ref, **TOL)
    assert jnp.allclose(qb3, qb3_ref, **TOL)

    print("KERNEL_OK")
</pallas_src>

<mosaic_0001>
module attributes {stable_mosaic.version = 11 : i64} {
  func.func @_critic_kernel_fused_l2(%arg0: i32, %arg1: memref<8x24xbf16, #tpu.memory_space<vmem>>, %arg2: memref<8x8xbf16, #tpu.memory_space<vmem>>, %arg3: memref<24x128xbf16, #tpu.memory_space<vmem>>, %arg4: memref<8x128xbf16, #tpu.memory_space<vmem>>, %arg5: memref<1x128xf32, #tpu.memory_space<vmem>>, %arg6: memref<128x128xbf16, #tpu.memory_space<vmem>>, %arg7: memref<1x128xf32, #tpu.memory_space<vmem>>, %arg8: memref<128x8xbf16, #tpu.memory_space<vmem>>, %arg9: memref<1x8xf32, #tpu.memory_space<vmem>>, %arg10: memref<8x8xf32, #tpu.memory_space<vmem>>) attributes {dimension_semantics = [#tpu.dimension_semantics<parallel>], iteration_bounds = array<i64: 1>, scalar_prefetch = 0 : i64, scratch_operands = 0 : i64, tpu.core_type = #tpu.core_type<tc>, window_params = [{transform_indices = @transform_0, window_bounds = array<i64: 8, 24>}, {transform_indices = @transform_1, window_bounds = array<i64: 8, 8>}, {pipeline_mode = #tpu.pipeline_mode<synchronous>, transform_indices = @transform_2, window_bounds = array<i64: 24, 128>}, {pipeline_mode = #tpu.pipeline_mode<synchronous>, transform_indices = @transform_3, window_bounds = array<i64: 8, 128>}, {pipeline_mode = #tpu.pipeline_mode<synchronous>, transform_indices = @transform_4, window_bounds = array<i64: 1, 128>}, {pipeline_mode = #tpu.pipeline_mode<synchronous>, transform_indices = @transform_5, window_bounds = array<i64: 128, 128>}, {pipeline_mode = #tpu.pipeline_mode<synchronous>, transform_indices = @transform_6, window_bounds = array<i64: 1, 128>}, {pipeline_mode = #tpu.pipeline_mode<synchronous>, transform_indices = @transform_7, window_bounds = array<i64: 128, 8>}, {pipeline_mode = #tpu.pipeline_mode<synchronous>, transform_indices = @transform_8, window_bounds = array<i64: 1, 8>}, {transform_indices = @transform_9, window_bounds = array<i64: 8, 8>}]} {
    %c0 = arith.constant 0 : index
    %c0_0 = arith.constant 0 : index
    %0 = vector.load %arg1[%c0, %c0_0] : memref<8x24xbf16, #tpu.memory_space<vmem>>, vector<8x24xbf16>
    %c0_1 = arith.constant 0 : index
    %c0_2 = arith.constant 0 : index
    %1 = vector.load %arg3[%c0_1, %c0_2] : memref<24x128xbf16, #tpu.memory_space<vmem>>, vector<24x128xbf16>
    %cst = arith.constant dense<0.000000e+00> : vector<8x128xf32>
    %2 = tpu.matmul %0, %1, %cst {dimension_numbers = #tpu.dot_dimension_numbers<[1], [0], [0], [1], [0, 0, 1, 1], [], []>} : vector<8x24xbf16>, vector<24x128xbf16>, vector<8x128xf32> -> vector<8x128xf32>
    %c0_3 = arith.constant 0 : index
    %c0_4 = arith.constant 0 : index
    %3 = vector.load %arg2[%c0_3, %c0_4] : memref<8x8xbf16, #tpu.memory_space<vmem>>, vector<8x8xbf16>
    %c0_5 = arith.constant 0 : index
    %c0_6 = arith.constant 0 : index
    %4 = vector.load %arg4[%c0_5, %c0_6] : memref<8x128xbf16, #tpu.memory_space<vmem>>, vector<8x128xbf16>
    %cst_7 = arith.constant dense<0.000000e+00> : vector<8x128xf32>
    %5 = tpu.matmul %3, %4, %cst_7 {dimension_numbers = #tpu.dot_dimension_numbers<[1], [0], [0], [1], [0, 0, 1, 1], [], []>} : vector<8x8xbf16>, vector<8x128xbf16>, vector<8x128xf32> -> vector<8x128xf32>
    %6 = arith.addf %2, %5 : vector<8x128xf32>
    %c0_8 = arith.constant 0 : index
    %c0_9 = arith.constant 0 : index
    %7 = vector.load %arg5[%c0_8, %c0_9] : memref<1x128xf32, #tpu.memory_space<vmem>>, vector<1x128xf32>
    %8 = vector.broadcast %7 : vector<1x128xf32> to vector<8x128xf32>
    %9 = arith.addf %6, %8 : vector<8x128xf32>
    %cst_10 = arith.constant 0.000000e+00 : f32
    %10 = vector.broadcast %cst_10 : f32 to vector<8x128xf32>
    %11 = arith.maximumf %9, %10 : vector<8x128xf32>
    %12 = arith.truncf %11 : vector<8x128xf32> to vector<8x128xbf16>
    %c0_11 = arith.constant 0 : index
    %c0_12 = arith.constant 0 : index
    %13 = vector.load %arg6[%c0_11, %c0_12] : memref<128x128xbf16, #tpu.memory_space<vmem>>, vector<128x128xbf16>
    %cst_13 = arith.constant dense<0.000000e+00> : vector<8x128xf32>
    %14 = tpu.matmul %12, %13, %cst_13 {dimension_numbers = #tpu.dot_dimension_numbers<[1], [0], [0], [1], [0, 0, 1, 1], [], []>} : vector<8x128xbf16>, vector<128x128xbf16>, vector<8x128xf32> -> vector<8x128xf32>
    %c0_14 = arith.constant 0 : index
    %c0_15 = arith.constant 0 : index
    %15 = vector.load %arg7[%c0_14, %c0_15] : memref<1x128xf32, #tpu.memory_space<vmem>>, vector<1x128xf32>
    %16 = vector.broadcast %15 : vector<1x128xf32> to vector<8x128xf32>
    %17 = arith.addf %14, %16 : vector<8x128xf32>
    %cst_16 = arith.constant 0.000000e+00 : f32
    %18 = vector.broadcast %cst_16 : f32 to vector<8x128xf32>
    %19 = arith.maximumf %17, %18 : vector<8x128xf32>
    %20 = arith.truncf %19 : vector<8x128xf32> to vector<8x128xbf16>
    %c0_17 = arith.constant 0 : index
    %c0_18 = arith.constant 0 : index
    %21 = vector.load %arg8[%c0_17, %c0_18] : memref<128x8xbf16, #tpu.memory_space<vmem>>, vector<128x8xbf16>
    %cst_19 = arith.constant dense<0.000000e+00> : vector<8x8xf32>
    %22 = tpu.matmul %20, %21, %cst_19 {dimension_numbers = #tpu.dot_dimension_numbers<[1], [0], [0], [1], [0, 0, 1, 1], [], []>} : vector<8x128xbf16>, vector<128x8xbf16>, vector<8x8xf32> -> vector<8x8xf32>
    %c0_20 = arith.constant 0 : index
    %c0_21 = arith.constant 0 : index
    %23 = vector.load %arg9[%c0_20, %c0_21] : memref<1x8xf32, #tpu.memory_space<vmem>>, vector<1x8xf32>
    %24 = vector.broadcast %23 : vector<1x8xf32> to vector<8x8xf32>
    %25 = arith.addf %22, %24 : vector<8x8xf32>
    %c0_22 = arith.constant 0 : index
    %c0_23 = arith.constant 0 : index
    %26 = vector.load %arg10[%c0_22, %c0_23] : memref<8x8xf32, #tpu.memory_space<vmem>>, vector<8x8xf32>
    tpu.vector_store %arg10[%c0_22, %c0_23], %25 {strides = array<i32>} : memref<8x8xf32, #tpu.memory_space<vmem>>, vector<8x8xf32>,
    return
  }
  func.func @transform_0(%arg0: i32) -> (i32, i32) {
    %c0_i32 = arith.constant 0 : i32
    %c0_i32_0 = arith.constant 0 : i32
    return %arg0, %c0_i32 : i32, i32
  }
  func.func @transform_1(%arg0: i32) -> (i32, i32) {
    %c0_i32 = arith.constant 0 : i32
    %c0_i32_0 = arith.constant 0 : i32
    return %arg0, %c0_i32 : i32, i32
  }
  func.func @transform_2(%arg0: i32) -> (i32, i32) {
    %c0_i32 = arith.constant 0 : i32
    %c0_i32_0 = arith.constant 0 : i32
    %c0_i32_1 = arith.constant 0 : i32
    return %c0_i32, %c0_i32_0 : i32, i32
  }
  func.func @transform_3(%arg0: i32) -> (i32, i32) {
    %c0_i32 = arith.constant 0 : i32
    %c0_i32_0 = arith.constant 0 : i32
    %c0_i32_1 = arith.constant 0 : i32
    return %c0_i32, %c0_i32_0 : i32, i32
  }
  func.func @transform_4(%arg0: i32) -> (i32, i32) {
    %c0_i32 = arith.constant 0 : i32
    %c0_i32_0 = arith.constant 0 : i32
    %c0_i32_1 = arith.constant 0 : i32
    return %c0_i32, %c0_i32_0 : i32, i32
  }
  func.func @transform_5(%arg0: i32) -> (i32, i32) {
    %c0_i32 = arith.constant 0 : i32
    %c0_i32_0 = arith.constant 0 : i32
    %c0_i32_1 = arith.constant 0 : i32
    return %c0_i32, %c0_i32_0 : i32, i32
  }
  func.func @transform_6(%arg0: i32) -> (i32, i32) {
    %c0_i32 = arith.constant 0 : i32
    %c0_i32_0 = arith.constant 0 : i32
    %c0_i32_1 = arith.constant 0 : i32
    return %c0_i32, %c0_i32_0 : i32, i32
  }
  func.func @transform_7(%arg0: i32) -> (i32, i32) {
    %c0_i32 = arith.constant 0 : i32
    %c0_i32_0 = arith.constant 0 : i32
    %c0_i32_1 = arith.constant 0 : i32
    return %c0_i32, %c0_i32_0 : i32, i32
  }
  func.func @transform_8(%arg0: i32) -> (i32, i32) {
    %c0_i32 = arith.constant 0 : i32
    %c0_i32_0 = arith.constant 0 : i32
    %c0_i32_1 = arith.constant 0 : i32
    return %c0_i32, %c0_i32_0 : i32, i32
  }
  func.func @transform_9(%arg0: i32) -> (i32, i32) {
    %c0_i32 = arith.constant 0 : i32
    %c0_i32_0 = arith.constant 0 : i32
    return %arg0, %c0_i32 : i32, i32
  }
}

</mosaic_0001>

<llo_original>
// kernel: critic_forward.1
$region0: #{critic_forward.1}
  #allocation0 [shape = 'u32[]', space=smem, size = 0x4, offset = 0x4, fixed_abs, tag = 'smem constant byte address 0x4 - core index']
  #allocation1 [shape = 'u32[144,128]{1,0:T(1,128)}', space=vmem, size = 0x12000, scoped, tag = 'internal scratch']
  %s0 = inlined_call_operand.vmem [shape: bf16[8,24], index: 0, kind: input, shape index: {}]
  %s1 = inlined_call_operand.vmem [shape: bf16[8,8], index: 1, kind: input, shape index: {}]
  %s2 = inlined_call_operand.vmem [shape: bf16[24,128], index: 2, kind: input, shape index: {}]
  %s3 = inlined_call_operand.vmem [shape: bf16[8,128], index: 3, kind: input, shape index: {}]
  %s4 = inlined_call_operand.vmem [shape: f32[1,128], index: 4, kind: input, shape index: {}]
  %s5 = inlined_call_operand.vmem [shape: bf16[128,128], index: 5, kind: input, shape index: {}]
  %s6 = inlined_call_operand.vmem [shape: f32[1,128], index: 6, kind: input, shape index: {}]
  %s7 = inlined_call_operand.vmem [shape: bf16[128,8], index: 7, kind: input, shape index: {}]
  %s8 = inlined_call_operand.vmem [shape: f32[1,8], index: 8, kind: input, shape index: {}]
  %s9 = inlined_call_operand.vmem [shape: f32[8,8], index: 9, kind: output, shape index: {}]
  %s10 = sld [smem:[#allocation0]]
  $region46: #{critic_forward.1} parent=0
    _
  %s12 = ssub.s32 1, %s10
  %s13 = scalar_select 0, %s12, %s10
  // Predicated region
  $region2: #{critic_forward.1} parent=0 // pred_check
    _
  $region3: #{critic_forward.1} parent=0 // pred_check_branch
    %15 = sbr.rel (0) target = $region5
  $region4: #{critic_forward.1} parent=0 // pred_region
    _
  $region5: #{critic_forward.1} parent=0 // pred_fallthru
    _
  // Predicated region
  $region6: #{critic_forward.1} parent=0 // pred_check
    _
  $region7: #{critic_forward.1} parent=0 // pred_check_branch
    %17 = sbr.rel (0) target = $region9
  $region8: #{critic_forward.1} parent=0 // pred_region
    _
  $region9: #{critic_forward.1} parent=0 // pred_fallthru
    _
  // Predicated region
  $region10: #{critic_forward.1} parent=0 // pred_check
    _
  $region11: #{critic_forward.1} parent=0 // pred_check_branch
    %19 = sbr.rel (0) target = $region13
  $region12: #{critic_forward.1} parent=0 // pred_region
    _
  $region13: #{critic_forward.1} parent=0 // pred_fallthru
    _
  // Predicated region
  $region14: #{critic_forward.1} parent=0 // pred_check
    _
  $region15: #{critic_forward.1} parent=0 // pred_check_branch
    %21 = sbr.rel (0) target = $region17
  $region16: #{critic_forward.1} parent=0 // pred_region
    _
  $region17: #{critic_forward.1} parent=0 // pred_fallthru
    _
  // Predicated region
  $region18: #{critic_forward.1} parent=0 // pred_check
    _
  $region19: #{critic_forward.1} parent=0 // pred_check_branch
    %23 = sbr.rel (0) target = $region21
  $region20: #{critic_forward.1} parent=0 // pred_region
    _
  $region21: #{critic_forward.1} parent=0 // pred_fallthru
    _
  // Predicated region
  $region22: #{critic_forward.1} parent=0 // pred_check
    _
  $region23: #{critic_forward.1} parent=0 // pred_check_branch
    %25 = sbr.rel (0) target = $region25
  $region24: #{critic_forward.1} parent=0 // pred_region
    _
  $region25: #{critic_forward.1} parent=0 // pred_fallthru
    _
  // Predicated region
  $region26: #{critic_forward.1} parent=0 // pred_check
    _
  $region27: #{critic_forward.1} parent=0 // pred_check_branch
    %27 = sbr.rel (0) target = $region29
  $region28: #{critic_forward.1} parent=0 // pred_region
    _
  $region29: #{critic_forward.1} parent=0 // pred_fallthru
    _
  // Predicated region
  $region30: #{critic_forward.1} parent=0 // pred_check
    _
  $region31: #{critic_forward.1} parent=0 // pred_check_branch
    %29 = sbr.rel (0) target = $region33
  $region32: #{critic_forward.1} parent=0 // pred_region
    _
  $region33: #{critic_forward.1} parent=0 // pred_fallthru
    _
  // Predicated region
  $region34: #{critic_forward.1} parent=0 // pred_check
    _
  $region35: #{critic_forward.1} parent=0 // pred_check_branch
    %31 = sbr.rel (0) target = $region37
  $region36: #{critic_forward.1} parent=0 // pred_region
    _
  $region37: #{critic_forward.1} parent=0 // pred_fallthru
    _
  %v33 = vld [vmem:[%s0] sm:$0xf]
  %v34 = vld [vmem:[%s2] sm:$0xf]
  %v35 = vld [vmem:[%s2 + $0x4] sm:$0xf]
  %v36 = vld [vmem:[%s2 + $0x8] sm:$0xf]
  %v37 = vld [vmem:[%s1] sm:$0xf]
  %v38 = vld [vmem:[%s3] sm:$0xf]
  %vm39 = vcmask 64512
  %v41 = vsel %vm39, %v37, 0
  %vm43 = vcmask 1043456
  %v45 = vsel %vm43, %v38, 0
  %47 = vmatprep.subr.bf16.mxu0 0
  %48 = vmatpush1.bf16.msra.mxu0 0
  %49 = vmatprep.subr.bf16.mxu0 0
  %50 = vmatpush1.bf16.msra.mxu0 0
  %51 = vmatprep.subr.bf16.mxu0 0
  %52 = vmatpush1.bf16.msra.mxu0 0
  %53 = vmatprep.subr.bf16.mxu0 0
  %54 = vmatpush1.bf16.msra.mxu0 0
  %55 = vmatprep.subr.bf16.mxu0 0
  %56 = vmatpush1.bf16.msra.mxu0 0
  %57 = vmatprep.subr.bf16.mxu0 0
  %58 = vmatpush1.bf16.msra.mxu0 0
  %59 = vmatprep.subr.bf16.mxu0 0
  %60 = vmatpush1.bf16.msra.mxu0 0
  %61 = vmatprep.subr.bf16.mxu0 0
  %62 = vmatpush1.bf16.msra.mxu0 %v45
  %63 = vmatprep.subr.bf16.mxu0 0
  %64 = vmatpush2.bf16.msra.mxu0 0
  %65 = vmatprep.subr.bf16.mxu0 0
  %66 = vmatpush2.bf16.msra.mxu0 0
  %67 = vmatprep.subr.bf16.mxu0 0
  %68 = vmatpush2.bf16.msra.mxu0 0
  %69 = vmatprep.subr.bf16.mxu0 0
  %70 = vmatpush2.bf16.msra.mxu0 0
  %71 = vmatprep.subr.bf16.mxu0 0
  %72 = vmatpush2.bf16.msra.mxu0 0
  %73 = vmatprep.subr.bf16.mxu0 0
  %74 = vmatpush2.bf16.msra.mxu0 0
  %75 = vmatprep.subr.bf16.mxu0 0
  %76 = vmatpush2.bf16.msra.mxu0 0
  %77 = vmatprep.subr.bf16.mxu0 0
  %78 = vmatpush2.bf16.msra.mxu0 0
  %79 = vmatprep.mubr.bf16.mxu0 0
  %80 = vmatmul.mubr.bf16.gmra.mxu0 %v41
  %v81 = vpop.f32.mrf.mxu0
  %v82 = vadd.f32 0.0, %v81
  %v83 = vpop.f32.mrf.mxu0
  %v84 = vpop.f32.mrf.mxu0
  %v85 = vpop.f32.mrf.mxu0
  %86 = vdwg.mxu0
  %v90 = vunpack.c.l.b16 %v34
  %v91 = vunpack.c.l.b16 %v35
  %v92 = vunpack.c.l.b16 %v36
  %v93 = vpack.c.b16 %v91, %v90
  %v94 = vpack.c.b16 %v92, %v92
  %vm96 = vcmask 195584
  %v98 = vsel %vm96, %v33, 0
  %v101 = vsel %vm43, %v94, 0
  %103 = vmatprep.subr.bf16.mxu0 0
  %104 = vmatpush1.bf16.msra.mxu0 0
  %105 = vmatprep.subr.bf16.mxu0 0
  %106 = vmatpush1.bf16.msra.mxu0 0
  %107 = vmatprep.subr.bf16.mxu0 0
  %108 = vmatpush1.bf16.msra.mxu0 0
  %109 = vmatprep.subr.bf16.mxu0 0
  %110 = vmatpush1.bf16.msra.mxu0 0
  %111 = vmatprep.subr.bf16.mxu0 0
  %112 = vmatpush1.bf16.msra.mxu0 0
  %113 = vmatprep.subr.bf16.mxu0 0
  %114 = vmatpush1.bf16.msra.mxu0 0
  %115 = vmatprep.subr.bf16.mxu0 0
  %116 = vmatpush1.bf16.msra.mxu0 %v101
  %117 = vmatprep.subr.bf16.mxu0 0
  %118 = vmatpush1.bf16.msra.mxu0 %v93
  %119 = vmatprep.subr.bf16.mxu0 0
  %120 = vmatpush2.bf16.msra.mxu0 0
  %121 = vmatprep.subr.bf16.mxu0 0
  %122 = vmatpush2.bf16.msra.mxu0 0
  %123 = vmatprep.subr.bf16.mxu0 0
  %124 = vmatpush2.bf16.msra.mxu0 0
  %125 = vmatprep.subr.bf16.mxu0 0
  %126 = vmatpush2.bf16.msra.mxu0 0
  %127 = vmatprep.subr.bf16.mxu0 0
  %128 = vmatpush2.bf16.msra.mxu0 0
  %129 = vmatprep.subr.bf16.mxu0 0
  %130 = vmatpush2.bf16.msra.mxu0 0
  %131 = vmatprep.subr.bf16.mxu0 0
  %132 = vmatpush2.bf16.msra.mxu0 0
  %133 = vmatprep.subr.bf16.mxu0 0
  %134 = vmatpush2.bf16.msra.mxu0 0
  %135 = vmatprep.mubr.bf16.mxu0 0
  %136 = vmatmul.mubr.bf16.gmra.mxu0 %v98
  %v137 = vpop.f32.mrf.mxu0
  %v138 = vadd.f32 %v82, %v137
  %v139 = vpop.f32.mrf.mxu0
  %v140 = vpop.f32.mrf.mxu0
  %v141 = vpop.f32.mrf.mxu0
  %142 = vdwg.mxu0
  %v143 = vld [vmem:[%s4] sm:$0x1]
  %v145 = vlaneseq
  %v146 = vshrl.u32 %v145, 7
  %v147 = vsub.s32 0, %v146
  %v148 = vrot.slane %v143, %v147
  %v150 = vadd.f32 %v138, %v148
  %v151 = vmax.f32 %v150, 0.0
  %v152 = vpack.c.bf16 %v151, %v151
  %v153 = vld [vmem:[%s5] sm:$0xf]
  %v154 = vld [vmem:[%s5 + $0x4] sm:$0xf]
  %v155 = vld [vmem:[%s5 + $0x8] sm:$0xf]
  %v156 = vld [vmem:[%s5 + $0xc] sm:$0xf]
  %v157 = vld [vmem:[%s5 + $0x10] sm:$0xf]
  %v158 = vld [vmem:[%s5 + $0x14] sm:$0xf]
  %v159 = vld [vmem:[%s5 + $0x18] sm:$0xf]
  %v160 = vld [vmem:[%s5 + $0x1c] sm:$0xf]
  %v161 = vld [vmem:[%s5 + $0x20] sm:$0xf]
  %v162 = vld [vmem:[%s5 + $0x24] sm:$0xf]
  %v163 = vld [vmem:[%s5 + $0x28] sm:$0xf]
  %v164 = vld [vmem:[%s5 + $0x2c] sm:$0xf]
  %v165 = vld [vmem:[%s5 + $0x30] sm:$0xf]
  %v166 = vld [vmem:[%s5 + $0x34] sm:$0xf]
  %v167 = vld [vmem:[%s5 + $0x38] sm:$0xf]
  %v168 = vld [vmem:[%s5 + $0x3c] sm:$0xf]
  %v169 = vld [vmem:[%s6] sm:$0x1]
  %v171 = vlaneseq
  %v172 = vshrl.u32 %v171, 7
  %v173 = vsub.s32 0, %v172
  %v174 = vrot.slane %v169, %v173
  %v192 = vunpack.c.l.b16 %v153
  %v193 = vunpack.c.l.b16 %v154
  %v194 = vunpack.c.l.b16 %v155
  %v195 = vunpack.c.l.b16 %v156
  %v196 = vunpack.c.l.b16 %v157
  %v197 = vunpack.c.l.b16 %v158
  %v198 = vunpack.c.l.b16 %v159
  %v199 = vunpack.c.l.b16 %v160
  %v200 = vunpack.c.l.b16 %v161
  %v201 = vunpack.c.l.b16 %v162
  %v202 = vunpack.c.l.b16 %v163
  %v203 = vunpack.c.l.b16 %v164
  %v204 = vunpack.c.l.b16 %v165
  %v205 = vunpack.c.l.b16 %v166
  %v206 = vunpack.c.l.b16 %v167
  %v207 = vunpack.c.l.b16 %v168
  %v208 = vpack.c.b16 %v193, %v192
  %v209 = vpack.c.b16 %v195, %v194
  %v210 = vpack.c.b16 %v197, %v196
  %v211 = vpack.c.b16 %v199, %v198
  %v212 = vpack.c.b16 %v201, %v200
  %v213 = vpack.c.b16 %v203, %v202
  %v214 = vpack.c.b16 %v205, %v204
  %v215 = vpack.c.b16 %v207, %v206
  %224 = vmatprep.subr.bf16.mxu0 0
  %225 = vmatpush1.bf16.msra.mxu0 %v215
  %226 = vmatprep.subr.bf16.mxu0 0
  %227 = vmatpush1.bf16.msra.mxu0 %v214
  %228 = vmatprep.subr.bf16.mxu0 0
  %229 = vmatpush1.bf16.msra.mxu0 %v213
  %230 = vmatprep.subr.bf16.mxu0 0
  %231 = vmatpush1.bf16.msra.mxu0 %v212
  %232 = vmatprep.subr.bf16.mxu0 0
  %233 = vmatpush1.bf16.msra.mxu0 %v211
  %234 = vmatprep.subr.bf16.mxu0 0
  %235 = vmatpush1.bf16.msra.mxu0 %v210
  %236 = vmatprep.subr.bf16.mxu0 0
  %237 = vmatpush1.bf16.msra.mxu0 %v209
  %238 = vmatprep.subr.bf16.mxu0 0
  %239 = vmatpush1.bf16.msra.mxu0 %v208
  %240 = vmatprep.subr.bf16.mxu0 0
  %241 = vmatpush2.bf16.msra.mxu0 0
  %242 = vmatprep.subr.bf16.mxu0 0
  %243 = vmatpush2.bf16.msra.mxu0 0
  %244 = vmatprep.subr.bf16.mxu0 0
  %245 = vmatpush2.bf16.msra.mxu0 0
  %246 = vmatprep.subr.bf16.mxu0 0
  %247 = vmatpush2.bf16.msra.mxu0 0
  %248 = vmatprep.subr.bf16.mxu0 0
  %249 = vmatpush2.bf16.msra.mxu0 0
  %250 = vmatprep.subr.bf16.mxu0 0
  %251 = vmatpush2.bf16.msra.mxu0 0
  %252 = vmatprep.subr.bf16.mxu0 0
  %253 = vmatpush2.bf16.msra.mxu0 0
  %254 = vmatprep.subr.bf16.mxu0 0
  %255 = vmatpush2.bf16.msra.mxu0 0
  %256 = vmatprep.mubr.bf16.mxu0 0
  %257 = vmatmul.mubr.bf16.gmra.mxu0 %v152
  %v258 = vpop.f32.mrf.mxu0
  %v259 = vadd.f32 %v174, %v258
  %v260 = vpop.f32.mrf.mxu0
  %v261 = vpop.f32.mrf.mxu0
  %v262 = vpop.f32.mrf.mxu0
  %263 = vdwg.mxu0
  %v264 = vmax.f32 %v259, 0.0
  %v265 = vpack.c.bf16 %v264, %v264
  %v266 = vld [vmem:[%s7] sm:$0xf]
  %v267 = vld [vmem:[%s7 + $0x4] sm:$0xf]
  %v268 = vld [vmem:[%s7 + $0x8] sm:$0xf]
  %v269 = vld [vmem:[%s7 + $0xc] sm:$0xf]
  %v270 = vld [vmem:[%s7 + $0x10] sm:$0xf]
  %v271 = vld [vmem:[%s7 + $0x14] sm:$0xf]
  %v272 = vld [vmem:[%s7 + $0x18] sm:$0xf]
  %v273 = vld [vmem:[%s7 + $0x1c] sm:$0xf]
  %v274 = vld [vmem:[%s7 + $0x20] sm:$0xf]
  %v275 = vld [vmem:[%s7 + $0x24] sm:$0xf]
  %v276 = vld [vmem:[%s7 + $0x28] sm:$0xf]
  %v277 = vld [vmem:[%s7 + $0x2c] sm:$0xf]
  %v278 = vld [vmem:[%s7 + $0x30] sm:$0xf]
  %v279 = vld [vmem:[%s7 + $0x34] sm:$0xf]
  %v280 = vld [vmem:[%s7 + $0x38] sm:$0xf]
  %v281 = vld [vmem:[%s7 + $0x3c] sm:$0xf]
  %v282 = vld [vmem:[%s8] sm:$0x1]
  %v284 = vlaneseq
  %v285 = vshrl.u32 %v284, 7
  %v286 = vsub.s32 0, %v285
  %v287 = vrot.slane %v282, %v286
  %v305 = vunpack.c.l.b16 %v266
  %v306 = vunpack.c.l.b16 %v267
  %v307 = vunpack.c.l.b16 %v268
  %v308 = vunpack.c.l.b16 %v269
  %v309 = vunpack.c.l.b16 %v270
  %v310 = vunpack.c.l.b16 %v271
  %v311 = vunpack.c.l.b16 %v272
  %v312 = vunpack.c.l.b16 %v273
  %v313 = vunpack.c.l.b16 %v274
  %v314 = vunpack.c.l.b16 %v275
  %v315 = vunpack.c.l.b16 %v276
  %v316 = vunpack.c.l.b16 %v277
  %v317 = vunpack.c.l.b16 %v278
  %v318 = vunpack.c.l.b16 %v279
  %v319 = vunpack.c.l.b16 %v280
  %v320 = vunpack.c.l.b16 %v281
  %v321 = vpack.c.b16 %v306, %v305
  %v322 = vpack.c.b16 %v308, %v307
  %v323 = vpack.c.b16 %v310, %v309
  %v324 = vpack.c.b16 %v312, %v311
  %v325 = vpack.c.b16 %v314, %v313
  %v326 = vpack.c.b16 %v316, %v315
  %v327 = vpack.c.b16 %v318, %v317
  %v328 = vpack.c.b16 %v320, %v319
  %337 = vmatprep.subr.bf16.mxu0 0
  %338 = vmatpush1.bf16.msra.mxu0 %v328
  %339 = vmatprep.subr.bf16.mxu0 0
  %340 = vmatpush1.bf16.msra.mxu0 %v327
  %341 = vmatprep.subr.bf16.mxu0 0
  %342 = vmatpush1.bf16.msra.mxu0 %v326
  %343 = vmatprep.subr.bf16.mxu0 0
  %344 = vmatpush1.bf16.msra.mxu0 %v325
  %345 = vmatprep.subr.bf16.mxu0 0
  %346 = vmatpush1.bf16.msra.mxu0 %v324
  %347 = vmatprep.subr.bf16.mxu0 0
  %348 = vmatpush1.bf16.msra.mxu0 %v323
  %349 = vmatprep.subr.bf16.mxu0 0
  %350 = vmatpush1.bf16.msra.mxu0 %v322
  %351 = vmatprep.subr.bf16.mxu0 0
  %352 = vmatpush1.bf16.msra.mxu0 %v321
  %353 = vmatprep.subr.bf16.mxu0 0
  %354 = vmatpush2.bf16.msra.mxu0 0
  %355 = vmatprep.subr.bf16.mxu0 0
  %356 = vmatpush2.bf16.msra.mxu0 0
  %357 = vmatprep.subr.bf16.mxu0 0
  %358 = vmatpush2.bf16.msra.mxu0 0
  %359 = vmatprep.subr.bf16.mxu0 0
  %360 = vmatpush2.bf16.msra.mxu0 0
  %361 = vmatprep.subr.bf16.mxu0 0
  %362 = vmatpush2.bf16.msra.mxu0 0
  %363 = vmatprep.subr.bf16.mxu0 0
  %364 = vmatpush2.bf16.msra.mxu0 0
  %365 = vmatprep.subr.bf16.mxu0 0
  %366 = vmatpush2.bf16.msra.mxu0 0
  %367 = vmatprep.subr.bf16.mxu0 0
  %368 = vmatpush2.bf16.msra.mxu0 0
  %369 = vmatprep.mubr.bf16.mxu0 0
  %370 = vmatmul.mubr.bf16.gmra.mxu0 %v265
  %v371 = vpop.f32.mrf.mxu0
  %v372 = vadd.f32 %v287, %v371
  %v373 = vpop.f32.mrf.mxu0
  %v374 = vpop.f32.mrf.mxu0
  %v375 = vpop.f32.mrf.mxu0
  %376 = vdwg.mxu0
  %377 = vst.msk [vmem:[%s9] sm:$0xff] %vm39, %v372
  // Predicated region
  $region38: #{critic_forward.1} parent=0 // pred_check
    _
  $region39: #{critic_forward.1} parent=0 // pred_check_branch
    %379 = sbr.rel (0) target = $region41
  $region40: #{critic_forward.1} parent=0 // pred_region
    _
  $region41: #{critic_forward.1} parent=0 // pred_fallthru
    _
  // Predicated region
  $region42: #{critic_forward.1} parent=0 // pred_check
    _
  $region43: #{critic_forward.1} parent=0 // pred_check_branch
    %381 = sbr.rel (0) target = $region45
  $region44: #{critic_forward.1} parent=0 // pred_region
    _
  $region45: #{critic_forward.1} parent=0 // pred_fallthru
    _

</llo_original>
